<compile_context>
chip_gen: v5e
topology: v5e:2x2
jax: 0.10.0
libtpu: 0.0.40
codegen_flags: <defaults>
</compile_context>

<pallas_src>
import functools
import math

import jax
import jax.numpy as jnp
from jax.experimental import pallas as pl
from jax.experimental.pallas import tpu as pltpu

_MIB = 1024 * 1024


def _pick_tile(dim, candidates):
    """Largest candidate tile that exactly divides `dim`; else the full dim."""
    for c in candidates:
        if dim >= c and dim % c == 0:
            return c
    return dim


# ----------------------------------------------------------------------------
# Tiled linear kernel: out = x @ w + b   (f32 accumulation, dot_dtype operands)
# ----------------------------------------------------------------------------
def _linear_kernel(x_ref, w_ref, b_ref, o_ref, acc_ref, *, dot_dtype):
    @pl.when(pl.program_id(2) == 0)
    def _init():
        acc_ref[...] = jnp.zeros_like(acc_ref)

    acc_ref[...] += jnp.dot(
        x_ref[...].astype(dot_dtype),
        w_ref[...].astype(dot_dtype),
        preferred_element_type=jnp.float32,
    )

    @pl.when(pl.program_id(2) == pl.num_programs(2) - 1)
    def _store():
        o_ref[...] = (acc_ref[...] + b_ref[...].astype(jnp.float32)).astype(o_ref.dtype)


def pallas_linear(x2d, w, b, *, dot_dtype=jnp.bfloat16):
    """x2d: (M, K), w: (K, N), b: (N,) -> (M, N)."""
    M, K = x2d.shape
    Kw, N = w.shape
    assert K == Kw
    dot_dtype = x2d.dtype if dot_dtype is None else dot_dtype

    # Pad rows to a multiple of 8 so a real tile always divides M (guards the
    # degenerate `_pick_tile` fallback flagged in the review).
    M_pad = -(-M // 8) * 8
    if M_pad != M:
        x2d = jnp.pad(x2d, ((0, M_pad - M), (0, 0)))

    tm = _pick_tile(M_pad, (1024, 512, 256, 128, 64, 32, 16, 8))
    tn = _pick_tile(N, (512, 256, 128))
    tk = _pick_tile(K, (512, 256, 128))
    grid = (M_pad // tm, N // tn, K // tk)

    itemsize = jnp.dtype(x2d.dtype).itemsize
    need = (2 * (tm * tk + tk * tn + tn) * itemsize   # double-buffered input blocks
            + 2 * tm * tn * itemsize                  # double-buffered output block
            + tm * tn * 4                             # f32 accumulator
            + 4 * _MIB)                               # headroom / internal scratch
    vmem_limit = int(min(max(need, 32 * _MIB), 64 * _MIB))

    cost = pl.CostEstimate(
        flops=2 * M_pad * N * K,
        transcendentals=0,
        bytes_accessed=(M_pad * K + K * N + M_pad * N + N) * itemsize,
    )

    out = pl.pallas_call(
        functools.partial(_linear_kernel, dot_dtype=dot_dtype),
        out_shape=jax.ShapeDtypeStruct((M_pad, N), x2d.dtype),
        grid=grid,
        in_specs=[
            pl.BlockSpec((tm, tk), lambda i, j, k: (i, k)),
            pl.BlockSpec((tk, tn), lambda i, j, k: (k, j)),
            pl.BlockSpec((1, tn), lambda i, j, k: (0, j)),
        ],
        out_specs=pl.BlockSpec((tm, tn), lambda i, j, k: (i, j)),
        scratch_shapes=[pltpu.VMEM((tm, tn), jnp.float32)],
        compiler_params=pltpu.CompilerParams(
            dimension_semantics=("parallel", "parallel", "arbitrary"),
            vmem_limit_bytes=vmem_limit,
        ),
        cost_estimate=cost,
    )(x2d, w, b.reshape(1, N))
    return out[:M] if M_pad != M else out


# ----------------------------------------------------------------------------
# Scaled-dot-product attention: ONE (batch, head) per grid step.
#   q : (1,1,Sq,d_k)  k,v : (1,1,Sk,d_k)  mask : (1,Mq,Sk) int32 (Mq = 1 or Sq)
#   out : (1,1,Sq,d_k)  attn (optional) : (1,1,Sq,Sk)
# ----------------------------------------------------------------------------
def _attention_kernel(mask_ref, q_ref, k_ref, v_ref, o_ref, a_ref=None, *,
                      scale, dot_dtype):
    # Scale q (Sq x d_k) once instead of scaling the Sq x Sk score tile.
    q = (q_ref[0, 0].astype(jnp.float32) * scale).astype(dot_dtype)   # (Sq, d_k)
    k = k_ref[0, 0].astype(dot_dtype)                                 # (Sk, d_k)
    v = v_ref[0, 0].astype(dot_dtype)                                 # (Sk, d_k)

    # Contract the last dims -> no explicit transpose of k materialized.
    scores = jnp.einsum("qd,kd->qk", q, k,
                        preferred_element_type=jnp.float32)           # (Sq, Sk)
    # In-kernel masking: compare+select on the score tile (VPU filler).
    scores = jnp.where(mask_ref[0] == 0, jnp.float32(-1e9), scores)

    # Numerically-stable softmax in f32; reciprocal on the EUP.
    scores = scores - jnp.max(scores, axis=-1, keepdims=True)
    p = jnp.exp(scores)
    p = p * pl.reciprocal(jnp.sum(p, axis=-1, keepdims=True), approx=True)

    p_dot = p.astype(dot_dtype)
    if a_ref is not None:
        if jnp.dtype(a_ref.dtype) == jnp.dtype(dot_dtype):
            a_ref[0, 0] = p_dot                      # reuse the cast
        else:
            a_ref[0, 0] = p.astype(a_ref.dtype)

    out = jnp.einsum("qk,kd->qd", p_dot, v,
                     preferred_element_type=jnp.float32)              # (Sq, d_k)
    o_ref[0, 0] = out.astype(o_ref.dtype)


def pallas_attention(q, k, v, mask_i32, *, dot_dtype=jnp.bfloat16, return_attn=True):
    """q: (B,h,Sq,d_k); k,v: (B,h,Sk,d_k); mask_i32: (B, Mq, Sk) int32."""
    B, h, Sq, d_k = q.shape
    Sk = k.shape[2]
    Mq = mask_i32.shape[1]
    dot_dtype = q.dtype if dot_dtype is None else dot_dtype
    scale = 1.0 / math.sqrt(d_k)

    kernel = functools.partial(_attention_kernel, scale=scale, dot_dtype=dot_dtype)

    q_spec = pl.BlockSpec((1, 1, Sq, d_k), lambda b, j: (b, j, 0, 0))
    kv_spec = pl.BlockSpec((1, 1, Sk, d_k), lambda b, j: (b, j, 0, 0))
    m_spec = pl.BlockSpec((1, Mq, Sk), lambda b, j: (b, 0, 0))
    o_spec = pl.BlockSpec((1, 1, Sq, d_k), lambda b, j: (b, j, 0, 0))

    itemsize = jnp.dtype(q.dtype).itemsize
    attn_hbm = B * h * Sq * Sk * itemsize if return_attn else 0
    cost = pl.CostEstimate(
        flops=4 * B * h * Sq * Sk * d_k,
        transcendentals=B * h * Sq * Sk,
        bytes_accessed=(B * h * (2 * Sq + 2 * Sk) * d_k) * itemsize
        + B * Mq * Sk * 4 + attn_hbm,
    )

    need = (2 * ((Sq + 2 * Sk) * d_k * itemsize + Mq * Sk * 4)     # input blocks
            + 2 * Sq * d_k * itemsize                               # ctx output block
            + (2 * Sq * Sk * itemsize if return_attn else 0)        # attn output block
            + 4 * Sq * Sk * 4                                       # f32 softmax temps
            + 4 * _MIB)
    vmem_limit = int(min(max(need, 32 * _MIB), 64 * _MIB))

    out_shape = jax.ShapeDtypeStruct((B, h, Sq, d_k), q.dtype)
    if return_attn:
        out_shape = (out_shape, jax.ShapeDtypeStruct((B, h, Sq, Sk), q.dtype))
        out_specs = (o_spec, pl.BlockSpec((1, 1, Sq, Sk), lambda b, j: (b, j, 0, 0)))
    else:
        out_specs = o_spec

    res = pl.pallas_call(
        kernel,
        out_shape=out_shape,
        grid=(B, h),
        in_specs=[m_spec, q_spec, kv_spec, kv_spec],
        out_specs=out_specs,
        compiler_params=pltpu.CompilerParams(
            dimension_semantics=("parallel", "parallel"),
            vmem_limit_bytes=vmem_limit,
        ),
        cost_estimate=cost,
    )(mask_i32, q, k, v)

    if return_attn:
        return res[0], res[1]
    return res, None


# ----------------------------------------------------------------------------
# Full MultiHeadedAttention forward
# ----------------------------------------------------------------------------
def prepare_params(params):
    """Pre-fuse the Q/K/V projection weights ONCE (avoid per-forward concat)."""
    p = dict(params)
    if params["wq"].shape == params["wk"].shape == params["wv"].shape:
        p["w_qkv"] = jnp.concatenate([params["wq"], params["wk"], params["wv"]], axis=1)
        p["b_qkv"] = jnp.concatenate([params["bq"], params["bk"], params["bv"]])
    return p


def multi_headed_attention(params, query, key, value, mask, h, *,
                           dot_dtype=jnp.bfloat16, return_attn=True):
    """params: dict with wq,bq,wk,bk,wv,bv,wo,bo (optionally w_qkv,b_qkv).

    Returns (out, attn) with attn=None when return_attn=False.
    Dropout on attention weights is identity (eval semantics).
    """
    B, Sq, d_model = query.shape
    Sk = key.shape[1]
    d_k = d_model // h

    if query is key and key is value:
        w_qkv = params.get("w_qkv")
        b_qkv = params.get("b_qkv")
        if w_qkv is None:   # fallback if params were not pre-fused
            w_qkv = jnp.concatenate([params["wq"], params["wk"], params["wv"]], axis=1)
            b_qkv = jnp.concatenate([params["bq"], params["bk"], params["bv"]])
        qkv = pallas_linear(query.reshape(B * Sq, d_model), w_qkv, b_qkv,
                            dot_dtype=dot_dtype)
        # TODO(synk): fold this head-split transpose into the attention BlockSpecs.
        qkv = qkv.reshape(B, Sq, 3, h, d_k).transpose(2, 0, 3, 1, 4)  # (3,B,h,S,d_k)
        q, k, v = qkv[0], qkv[1], qkv[2]
    else:
        def proj(x, w, b):
            Bx, Sx, Dx = x.shape
            y = pallas_linear(x.reshape(Bx * Sx, Dx), w, b, dot_dtype=dot_dtype)
            return y.reshape(Bx, Sx, h, d_k).transpose(0, 2, 1, 3)    # (B,h,S,d_k)

        q = proj(query, params["wq"], params["bq"])
        k = proj(key, params["wk"], params["bk"])
        v = proj(value, params["wv"], params["bv"])

    if mask is None:
        mask_i32 = jnp.ones((B, 1, Sk), jnp.int32)
    else:
        if mask.ndim == 2:
            mask = mask[:, None, :]
        mask_i32 = mask.astype(jnp.int32)

    x, attn = pallas_attention(q, k, v, mask_i32, dot_dtype=dot_dtype,
                               return_attn=return_attn)

    # TODO(synk): fold this head-merge transpose into the attention out_spec
    # (emit context directly in lane-dense (B, S, h*d_k) layout).
    x = x.transpose(0, 2, 1, 3).reshape(B * Sq, d_model)
    out = pallas_linear(x, params["wo"], params["bo"], dot_dtype=dot_dtype)
    return out.reshape(B, Sq, d_model), attn


# ----------------------------------------------------------------------------
# Pure-JAX reference (mirrors the PyTorch forward exactly, eval-mode dropout)
# ----------------------------------------------------------------------------
def reference(params, query, key, value, mask, h):
    B, Sq, d_model = query.shape
    d_k = d_model // h

    def lin(x, w, b):
        return x @ w + b

    def heads(x):
        Bx, Sx, _ = x.shape
        return x.reshape(Bx, Sx, h, d_k).transpose(0, 2, 1, 3)

    q = heads(lin(query, params["wq"], params["bq"]))
    k = heads(lin(key, params["wk"], params["bk"]))
    v = heads(lin(value, params["wv"], params["bv"]))
    scores = jnp.einsum("bhqd,bhkd->bhqk", q, k) / math.sqrt(d_k)
    if mask is not None:
        m = mask[:, None, None, :] if mask.ndim == 2 else mask[:, None, :, :]
        scores = jnp.where(m == 0, -1e9, scores)
    p = jax.nn.softmax(scores, axis=-1)
    x = jnp.einsum("bhqk,bhkd->bhqd", p, v)
    x = x.transpose(0, 2, 1, 3).reshape(B, Sq, d_model)
    return lin(x, params["wo"], params["bo"]), p


if __name__ == "__main__":
    B, S, d_model, h = 2, 8, 32, 4

    key0 = jax.random.PRNGKey(0)
    ks = jax.random.split(key0, 12)
    scale = 1.0 / math.sqrt(d_model)
    params = {
        "wq": jax.random.uniform(ks[0], (d_model, d_model), jnp.float32, -scale, scale),
        "bq": jax.random.uniform(ks[1], (d_model,), jnp.float32, -scale, scale),
        "wk": jax.random.uniform(ks[2], (d_model, d_model), jnp.float32, -scale, scale),
        "bk": jax.random.uniform(ks[3], (d_model,), jnp.float32, -scale, scale),
        "wv": jax.random.uniform(ks[4], (d_model, d_model), jnp.float32, -scale, scale),
        "bv": jax.random.uniform(ks[5], (d_model,), jnp.float32, -scale, scale),
        "wo": jax.random.uniform(ks[6], (d_model, d_model), jnp.float32, -scale, scale),
        "bo": jax.random.uniform(ks[7], (d_model,), jnp.float32, -scale, scale),
    }
    fused_params = prepare_params(params)   # QKV weights fused once, not per forward

    query = jax.random.normal(ks[8], (B, S, d_model), jnp.float32)
    keyx = jax.random.normal(ks[9], (B, S, d_model), jnp.float32)
    value = jax.random.normal(ks[10], (B, S, d_model), jnp.float32)
    # padding mask: batch 0 fully valid, batch 1 has last 2 positions masked out
    mask = jnp.concatenate(
        [jnp.ones((1, S), jnp.int32),
         jnp.concatenate([jnp.ones((1, S - 2), jnp.int32),
                          jnp.zeros((1, 2), jnp.int32)], axis=1)],
        axis=0,
    )

    # --- case 1: self-attention, fused QKV, f32 MXU operands (tight tolerance) ---
    out1, attn1 = multi_headed_attention(fused_params, query, query, query, mask, h,
                                         dot_dtype=jnp.float32)
    jax.block_until_ready((out1, attn1))
    ref_out1, ref_attn1 = reference(params, query, query, query, mask, h)
    assert out1.shape == (B, S, d_model)
    assert attn1.shape == (B, h, S, S)
    assert jnp.allclose(out1, ref_out1, atol=2e-3, rtol=2e-3)
    assert jnp.allclose(attn1, ref_attn1, atol=2e-3, rtol=2e-3)

    # --- case 2: distinct query/key/value -> separate projection path, f32 ---
    out2, attn2 = multi_headed_attention(params, query, keyx, value, mask, h,
                                         dot_dtype=jnp.float32)
    jax.block_until_ready((out2, attn2))
    ref_out2, ref_attn2 = reference(params, query, keyx, value, mask, h)
    assert jnp.allclose(out2, ref_out2, atol=2e-3, rtol=2e-3)
    assert jnp.allclose(attn2, ref_attn2, atol=2e-3, rtol=2e-3)

    # --- case 3: default bf16 MXU operands with f32 accumulation (looser tol) ---
    out3, attn3 = multi_headed_attention(fused_params, query, query, query, mask, h)
    jax.block_until_ready((out3, attn3))
    assert jnp.allclose(out3, ref_out1, atol=3e-2, rtol=3e-2)
    assert jnp.allclose(attn3, ref_attn1, atol=3e-2, rtol=3e-2)

    # --- case 4: 3-D (decoder-style) mask, probability output skipped ---
    mask3d = jnp.broadcast_to(jnp.tril(jnp.ones((S, S), jnp.int32)), (B, S, S))
    out4, attn4 = multi_headed_attention(fused_params, query, query, query, mask3d, h,
                                         dot_dtype=jnp.float32, return_attn=False)
    out4 = jax.block_until_ready(out4)
    ref_out4, _ = reference(params, query, query, query, mask3d, h)
    assert attn4 is None
    assert jnp.allclose(out4, ref_out4, atol=2e-3, rtol=2e-3)

    print("KERNEL_OK")
</pallas_src>

<mosaic_0001>
module attributes {stable_mosaic.version = 11 : i64} {
  func.func @_linear_kernel(%arg0: i32, %arg1: i32, %arg2: i32, %arg3: memref<16x32xf32, #tpu.memory_space<vmem>>, %arg4: memref<32x96xf32, #tpu.memory_space<vmem>>, %arg5: memref<1x96xf32, #tpu.memory_space<vmem>>, %arg6: memref<16x96xf32, #tpu.memory_space<vmem>>, %arg7: memref<16x96xf32, #tpu.memory_space<vmem>>) attributes {dimension_semantics = [#tpu.dimension_semantics<parallel>, #tpu.dimension_semantics<parallel>, #tpu.dimension_semantics<arbitrary>], iteration_bounds = array<i64: 1, 1, 1>, scalar_prefetch = 0 : i64, scratch_operands = 1 : i64, tpu.core_type = #tpu.core_type<tc>, window_params = [{transform_indices = @transform_0, window_bounds = array<i64: 16, 32>}, {transform_indices = @transform_1, window_bounds = array<i64: 32, 96>}, {transform_indices = @transform_2, window_bounds = array<i64: 1, 96>}, {transform_indices = @transform_3, window_bounds = array<i64: 16, 96>}]} {
    %c0_i32 = arith.constant 0 : i32
    %0 = arith.cmpi eq, %arg2, %c0_i32 : i32
    %1 = arith.extui %0 : i1 to i32
    %c0_i32_0 = arith.constant 0 : i32
    %2 = arith.cmpi ne, %1, %c0_i32_0 : i32
    scf.if %2 {
      %cst_10 = arith.constant 0.000000e+00 : f32
      %12 = vector.broadcast %cst_10 : f32 to vector<16x96xf32>
      %c0_11 = arith.constant 0 : index
      %c0_12 = arith.constant 0 : index
      %13 = vector.load %arg7[%c0_11, %c0_12] : memref<16x96xf32, #tpu.memory_space<vmem>>, vector<16x96xf32>
      tpu.vector_store %arg7[%c0_11, %c0_12], %12 {strides = array<i32>} : memref<16x96xf32, #tpu.memory_space<vmem>>, vector<16x96xf32>,
    } else {
    }
    %c0 = arith.constant 0 : index
    %c0_1 = arith.constant 0 : index
    %3 = vector.load %arg7[%c0, %c0_1] : memref<16x96xf32, #tpu.memory_space<vmem>>, vector<16x96xf32>
    %c0_2 = arith.constant 0 : index
    %c0_3 = arith.constant 0 : index
    %4 = vector.load %arg3[%c0_2, %c0_3] : memref<16x32xf32, #tpu.memory_space<vmem>>, vector<16x32xf32>
    %c0_4 = arith.constant 0 : index
    %c0_5 = arith.constant 0 : index
    %5 = vector.load %arg4[%c0_4, %c0_5] : memref<32x96xf32, #tpu.memory_space<vmem>>, vector<32x96xf32>
    %cst = arith.constant dense<0.000000e+00> : vector<16x96xf32>
    %6 = tpu.matmul %4, %5, %cst {dimension_numbers = #tpu.dot_dimension_numbers<[1], [0], [0], [1], [0, 0, 1, 1], [], []>} : vector<16x32xf32>, vector<32x96xf32>, vector<16x96xf32> -> vector<16x96xf32>
    %7 = arith.addf %3, %6 : vector<16x96xf32>
    %c0_6 = arith.constant 0 : index
    %c0_7 = arith.constant 0 : index
    %8 = vector.load %arg7[%c0_6, %c0_7] : memref<16x96xf32, #tpu.memory_space<vmem>>, vector<16x96xf32>
    tpu.vector_store %arg7[%c0_6, %c0_7], %7 {strides = array<i32>} : memref<16x96xf32, #tpu.memory_space<vmem>>, vector<16x96xf32>,
    %c0_i32_8 = arith.constant 0 : i32
    %9 = arith.cmpi eq, %arg2, %c0_i32_8 : i32
    %10 = arith.extui %9 : i1 to i32
    %c0_i32_9 = arith.constant 0 : i32
    %11 = arith.cmpi ne, %10, %c0_i32_9 : i32
    scf.if %11 {
      %c0_10 = arith.constant 0 : index
      %c0_11 = arith.constant 0 : index
      %12 = vector.load %arg7[%c0_10, %c0_11] : memref<16x96xf32, #tpu.memory_space<vmem>>, vector<16x96xf32>
      %c0_12 = arith.constant 0 : index
      %c0_13 = arith.constant 0 : index
      %13 = vector.load %arg5[%c0_12, %c0_13] : memref<1x96xf32, #tpu.memory_space<vmem>>, vector<1x96xf32>
      %14 = vector.broadcast %13 : vector<1x96xf32> to vector<16x96xf32>
      %15 = arith.addf %12, %14 : vector<16x96xf32>
      %c0_14 = arith.constant 0 : index
      %c0_15 = arith.constant 0 : index
      %16 = vector.load %arg6[%c0_14, %c0_15] : memref<16x96xf32, #tpu.memory_space<vmem>>, vector<16x96xf32>
      tpu.vector_store %arg6[%c0_14, %c0_15], %15 {strides = array<i32>} : memref<16x96xf32, #tpu.memory_space<vmem>>, vector<16x96xf32>,
    } else {
    }
    return
  }
  func.func @transform_0(%arg0: i32, %arg1: i32, %arg2: i32) -> (i32, i32) {
    %c0_i32 = arith.constant 0 : i32
    return %arg0, %arg2 : i32, i32
  }
  func.func @transform_1(%arg0: i32, %arg1: i32, %arg2: i32) -> (i32, i32) {
    %c0_i32 = arith.constant 0 : i32
    return %arg2, %arg1 : i32, i32
  }
  func.func @transform_2(%arg0: i32, %arg1: i32, %arg2: i32) -> (i32, i32) {
    %c0_i32 = arith.constant 0 : i32
    %c0_i32_0 = arith.constant 0 : i32
    return %c0_i32, %arg1 : i32, i32
  }
  func.func @transform_3(%arg0: i32, %arg1: i32, %arg2: i32) -> (i32, i32) {
    %c0_i32 = arith.constant 0 : i32
    return %arg0, %arg1 : i32, i32
  }
}

</mosaic_0001>

<llo_original>
// kernel: tpu_custom_call.1
$region0: #{tpu_custom_call.1}
  #allocation0 [shape = 'u32[]', space=smem, size = 0x4, offset = 0x4, fixed_abs, tag = 'smem constant byte address 0x4 - core index']
  #allocation1 [shape = 'u32[72,128]{1,0:T(1,128)}', space=vmem, size = 0x9000, scoped, tag = 'internal scratch']
  #allocation2 [shape = 'f32[16,96]{1,0:T(8,128)}', space=vmem, size = 0x2000, scoped, tag = 'scratch operand']
  %s0 = inlined_call_operand.hbm [shape: f32[16,32], index: 0, kind: input, shape index: {}]
  %s1 = inlined_call_operand.hbm [shape: f32[32,96], index: 1, kind: input, shape index: {}]
  %s2 = inlined_call_operand.vmem [shape: f32[1,96], index: 2, kind: input, shape index: {}]
  %s3 = inlined_call_operand.hbm [shape: f32[16,96], index: 3, kind: output, shape index: {}]
  %s4 = sld [smem:[#allocation0]]
  $region38: #{tpu_custom_call.1} parent=0
    _
  %s6 = ssub.s32 1, %s4
  %s7 = scalar_select 0, %s6, %s4
  $region1: #{tpu_custom_call.1} parent=0
    #allocation3 [shape = 'u8[8192]{0}', space=vmem, size = 0x2000, scoped, tag = 'input window, operand 0, single buffered']
    #allocation4 [shape = 's32[1]{0}', space=sflag, size = 0x4, scoped, tag = 'scoped memory for tpu_custom_call.1']
    #allocation5 [shape = 's32[1]{0}', space=sflag, size = 0x4, scoped, tag = 'scoped memory for tpu_custom_call.1']
    #allocation6 [shape = 'u8[16384]{0}', space=vmem, size = 0x4000, scoped, tag = 'input window, operand 1, single buffered']
    #allocation7 [shape = 's32[1]{0}', space=sflag, size = 0x4, scoped, tag = 'scoped memory for tpu_custom_call.1']
    #allocation8 [shape = 'u8[8192]{0}', space=vmem, size = 0x2000, scoped, tag = 'output window, operand 0, single buffered']
    %8 = vsyncpa [#allocation4], 0
    %9 = vsyncpa [#allocation7], 0
    %10 = vsyncpa [#allocation5], 0
    // Predicated region
    $region2: #{tpu_custom_call.1} parent=1 // pred_check
      _
    $region3: #{tpu_custom_call.1} parent=1 // pred_check_branch
      %12 = sbr.rel (0) target = $region5
    $region4: #{tpu_custom_call.1} parent=1 // pred_region
      %14 = vsyncadd [#allocation4], 0
      %s15 = sshll.u32 %s0, 4
      %s16 = int_to_ptr.hbm [resolvable:$true] %s15
      %s17 = sshll.u32 [#allocation3], 4
      %s18 = int_to_ptr.vmem [resolvable:$true] %s17
      %23 = dma.hbm_to_vmem [thread:$0]  %s16, 256, %s18, [#allocation4], 128, 128, 8
    $region5: #{tpu_custom_call.1} parent=1 // pred_fallthru
      _
    // Predicated region
    $region6: #{tpu_custom_call.1} parent=1 // pred_check
      _
    $region7: #{tpu_custom_call.1} parent=1 // pred_check_branch
      %25 = sbr.rel (0) target = $region9
    $region8: #{tpu_custom_call.1} parent=1 // pred_region
      %27 = vsyncadd [#allocation7], 0
      %s28 = sshll.u32 %s1, 4
      %s29 = int_to_ptr.hbm [resolvable:$true] %s28
      %s30 = sshll.u32 [#allocation6], 4
      %s31 = int_to_ptr.vmem [resolvable:$true] %s30
      %36 = dma.hbm_to_vmem [thread:$0]  %s29, 512, %s31, [#allocation7], 128, 128, 8
    $region9: #{tpu_custom_call.1} parent=1 // pred_fallthru
      _
    // Predicated region
    $region10: #{tpu_custom_call.1} parent=1 // pred_check
      _
    $region11: #{tpu_custom_call.1} parent=1 // pred_check_branch
      %38 = sbr.rel (0) target = $region13
    $region12: #{tpu_custom_call.1} parent=1 // pred_region
      _
    $region13: #{tpu_custom_call.1} parent=1 // pred_fallthru
      _
    // Predicated region
    $region14: #{tpu_custom_call.1} parent=1 // pred_check
      _
    $region15: #{tpu_custom_call.1} parent=1 // pred_check_branch
      %40 = sbr.rel (0) target = $region17
    $region16: #{tpu_custom_call.1} parent=1 // pred_region
      %42 = dma.done [#allocation4], 256
    $region17: #{tpu_custom_call.1} parent=1 // pred_fallthru
      _
    // Predicated region
    $region18: #{tpu_custom_call.1} parent=1 // pred_check
      _
    $region19: #{tpu_custom_call.1} parent=1 // pred_check_branch
      %44 = sbr.rel (0) target = $region21
    $region20: #{tpu_custom_call.1} parent=1 // pred_region
      %46 = dma.done [#allocation7], 512
    $region21: #{tpu_custom_call.1} parent=1 // pred_fallthru
      _
    %p47 = scmp.eq.s32.totalorder 0, 0
    // Predicated region
    $region22: #{tpu_custom_call.1} parent=1 // pred_check
      %p48 = pneg %p47
    $region23: #{tpu_custom_call.1} parent=1 // pred_check_branch
      %50 = sbr.rel (%p48) target = $region25
    $region24: #{tpu_custom_call.1} parent=1 // pred_region
      %vm51 = vcmask 785408
      %52 = vst.msk [vmem:[#allocation2] sm:$0xff] %vm51, 0.0
      %53 = vst.msk [vmem:[#allocation2 + $0x8] sm:$0xff] %vm51, 0.0
    $region25: #{tpu_custom_call.1} parent=1 // pred_fallthru
      _
    %v54 = vld [vmem:[#allocation2] sm:$0xff]
    %v55 = vld [vmem:[#allocation2 + $0x8] sm:$0xff]
    %v56 = vld [vmem:[#allocation3] sm:$0xff]
    %v57 = vld [vmem:[#allocation3 + $0x8] sm:$0xff]
    %v58 = vld [vmem:[#allocation6] sm:$0xff]
    %v59 = vld [vmem:[#allocation6 + $0x8] sm:$0xff]
    %v60 = vld [vmem:[#allocation6 + $0x10] sm:$0xff]
    %v61 = vld [vmem:[#allocation6 + $0x18] sm:$0xff]
    %vm62 = vcmask 261120
    %v64 = vsel %vm62, %v56, 0
    %v67 = vsel %vm62, %v57, 0
    %69 = vmatpush.msra.mxu0 0.0
    %70 = vmatpush.msra.mxu0 0.0
    %71 = vmatpush.msra.mxu0 0.0
    %72 = vmatpush.msra.mxu0 0.0
    %73 = vmatpush.msra.mxu0 0.0
    %74 = vmatpush.msra.mxu0 0.0
    %75 = vmatpush.msra.mxu0 0.0
    %76 = vmatpush.msra.mxu0 0.0
    %77 = vmatpush.msra.mxu0 0.0
    %78 = vmatpush.msra.mxu0 0.0
    %79 = vmatpush.msra.mxu0 0.0
    %80 = vmatpush.msra.mxu0 0.0
    %81 = vmatpush.msra.mxu0 %v61
    %82 = vmatpush.msra.mxu0 %v60
    %83 = vmatpush.msra.mxu0 %v59
    %84 = vmatpush.msra.mxu0 %v58
    %85 = vmatmul.f32.gmra.mxu0 %v64
    %v86 = vpop.f32.mrf.mxu0
    %v87 = vadd.f32 0.0, %v86
    %88 = vmatmul.f32.gmra.mxu0 %v67
    %v89 = vpop.f32.mrf.mxu0
    %v90 = vadd.f32 0.0, %v89
    %91 = vdwg.mxu0
    %v92 = vadd.f32 %v54, %v87
    %v93 = vadd.f32 %v55, %v90
    %vm94 = vcmask 785408
    %95 = vst.msk [vmem:[#allocation2] sm:$0xff] %vm94, %v92
    %96 = vst.msk [vmem:[#allocation2 + $0x8] sm:$0xff] %vm94, %v93
    // Predicated region
    $region26: #{tpu_custom_call.1} parent=1 // pred_check
      %p97 = pneg %p47
    $region27: #{tpu_custom_call.1} parent=1 // pred_check_branch
      %99 = sbr.rel (%p97) target = $region29
    $region28: #{tpu_custom_call.1} parent=1 // pred_region
      %v100 = vld [vmem:[#allocation2] sm:$0xff]
      %v101 = vld [vmem:[#allocation2 + $0x8] sm:$0xff]
      %v102 = vld [vmem:[%s2] sm:$0x1]
      %v104 = vperm.slane %v102, 0
      %v106 = vadd.f32 %v100, %v104
      %v107 = vadd.f32 %v101, %v104
      %108 = vst.msk [vmem:[#allocation8] sm:$0xff] %vm94, %v106
      %109 = vst.msk [vmem:[#allocation8 + $0x8] sm:$0xff] %vm94, %v107
    $region29: #{tpu_custom_call.1} parent=1 // pred_fallthru
      _
    // Predicated region
    $region30: #{tpu_custom_call.1} parent=1 // pred_check
      _
    $region31: #{tpu_custom_call.1} parent=1 // pred_check_branch
      %111 = sbr.rel (0) target = $region33
    $region32: #{tpu_custom_call.1} parent=1 // pred_region
      %113 = vsyncadd [#allocation5], 0
      %s114 = sshll.u32 [#allocation8], 4
      %s115 = int_to_ptr.vmem [resolvable:$true] %s114
      %s116 = sshll.u32 %s3, 4
      %s117 = int_to_ptr.hbm [resolvable:$true] %s116
      %122 = dma.vmem_to_hbm [thread:$0]  %s115, 256, %s117, [#allocation5], 128, 128, 8
    $region33: #{tpu_custom_call.1} parent=1 // pred_fallthru
      _
    // Predicated region
    $region34: #{tpu_custom_call.1} parent=1 // pred_check
      _
    $region35: #{tpu_custom_call.1} parent=1 // pred_check_branch
      %124 = sbr.rel (0) target = $region37
    $region36: #{tpu_custom_call.1} parent=1 // pred_region
      %126 = dma.done [#allocation5], 256
    $region37: #{tpu_custom_call.1} parent=1 // pred_fallthru
      _
    %127 = vsyncpa [#allocation4], 1
    %128 = vsyncpa [#allocation7], 1
    %129 = vsyncpa [#allocation5], 1

</llo_original>
